<compile_context>
chip_gen: v7x
topology: tpu7x:2x2x1
jax: 0.10.0
libtpu: 0.0.40
codegen_flags: <defaults>
</compile_context>

<pallas_src>
import functools

import jax
import jax.numpy as jnp
from jax import lax
from jax.experimental import pallas as pl
from jax.experimental.pallas import tpu as pltpu


def _lstm_kernel(x_ref, wih_ref, whh_ref, b_ref, out_ref, xw_ref, *,
                 seq_len, batch, hidden):
    """Single-layer LSTM forward, zero initial state.

    x_ref:   (T*B, D)  mxu dtype  -- flattened time-major input
    wih_ref: (D, 4H)   mxu dtype  -- W_ih^T, g-gate columns pre-scaled by 2
    whh_ref: (H, 4H)   mxu dtype  -- W_hh^T, g-gate columns pre-scaled by 2
    b_ref:   (1, 4H)   f32        -- b_ih + b_hh, g-gate entries pre-scaled by 2
    out_ref: (T*B, H)             -- full hidden-state sequence
    xw_ref:  (T*B, 4H) f32 scratch -- hoisted input projection
    Gate order [i, f, g, o] matches torch.nn.LSTM.
    """
    B, H = batch, hidden

    # Hoisted input projection over all timesteps: one MXU matmul + bias,
    # parked in VMEM scratch so the recurrence doesn't carry it in vregs.
    xw_ref[...] = (
        jnp.dot(x_ref[...], wih_ref[...], preferred_element_type=jnp.float32)
        + b_ref[...]
    )

    h0 = jnp.zeros((B, H), jnp.float32)
    c0 = jnp.zeros((B, H), jnp.float32)

    def step(t, carry):
        h, c = carry
        row = pl.multiple_of(t * B, B)
        xw_t = xw_ref[pl.ds(row, B), :]                                   # (B, 4H) f32
        gates = xw_t + jnp.dot(
            h.astype(whh_ref.dtype), whh_ref[...],
            preferred_element_type=jnp.float32,
        )                                                                 # (B, 4H) f32
        # Single full-width EUP push; tanh(z) recovered as 2*sigmoid(2z) - 1
        # because the g-gate pre-activations were pre-scaled by 2.
        sig = jax.nn.sigmoid(gates)
        i_g = sig[:, 0 * H:1 * H]
        f_g = sig[:, 1 * H:2 * H]
        g_g = 2.0 * sig[:, 2 * H:3 * H] - 1.0
        o_g = sig[:, 3 * H:4 * H]

        c_new = f_g * c + i_g * g_g
        h_new = o_g * jnp.tanh(c_new)
        # Per-step store is off the h/c critical path; out_ref stays whole-block
        # VMEM resident so the HBM writeback is still a single end-of-kernel DMA.
        out_ref[pl.ds(row, B), :] = h_new.astype(out_ref.dtype)
        return (h_new, c_new)

    lax.fori_loop(0, seq_len, step, (h0, c0), unroll=True)


def prepare_lstm_params(w_ih, w_hh, b_ih, b_hh, *, mxu_dtype=jnp.bfloat16):
    """One-time parameter preparation (do this at load time, not per forward).

    - Transposes weights to (D, 4H) / (H, 4H) for the kernel's matmul layout.
    - Pre-scales the g-gate (rows 2H:3H in PyTorch layout) of both weights and
      the combined bias by 2 so the kernel can use tanh(z) = 2*sigmoid(2z) - 1.
    - Casts matmul operands to mxu_dtype (bf16 by default); bias stays f32.
    """
    four_h, _ = w_ih.shape
    H = four_h // 4
    gate_scale = jnp.concatenate([
        jnp.ones((2 * H,), jnp.float32),        # i, f
        jnp.full((H,), 2.0, jnp.float32),       # g (tanh-via-sigmoid)
        jnp.ones((H,), jnp.float32),            # o
    ])
    wih_t = jnp.transpose(w_ih * gate_scale[:, None]).astype(mxu_dtype)   # (D, 4H)
    whh_t = jnp.transpose(w_hh * gate_scale[:, None]).astype(mxu_dtype)   # (H, 4H)
    bias = ((b_ih + b_hh) * gate_scale).astype(jnp.float32).reshape(1, four_h)
    return wih_t, whh_t, bias


def gentle_push_late_lstm_prepared(x, wih_t, whh_t, bias):
    """Forward pass given already-prepared parameters.

    x: (T, B, D) float32, time-major (PyTorch batch_first=False default).
    Returns (T, B, H) with x.dtype -- full hidden-state sequence.
    """
    T, B, D = x.shape
    four_h = wih_t.shape[1]
    H = four_h // 4

    x2d = x.reshape(T * B, D).astype(wih_t.dtype)                         # (T*B, D)
    kernel = functools.partial(_lstm_kernel, seq_len=T, batch=B, hidden=H)

    vmem = pl.BlockSpec(memory_space=pltpu.MemorySpace.VMEM)  # whole array, VMEM resident
    out = pl.pallas_call(
        kernel,
        out_shape=jax.ShapeDtypeStruct((T * B, H), x.dtype),
        in_specs=[vmem, vmem, vmem, vmem],
        out_specs=vmem,
        scratch_shapes=[pltpu.VMEM((T * B, four_h), jnp.float32)],
    )(x2d, wih_t, whh_t, bias)
    return out.reshape(T, B, H)


def gentle_push_late_lstm(x, w_ih, w_hh, b_ih, b_hh, *, mxu_dtype=jnp.bfloat16):
    """Convenience wrapper: prepare params then run the forward pass."""
    params = prepare_lstm_params(w_ih, w_hh, b_ih, b_hh, mxu_dtype=mxu_dtype)
    return gentle_push_late_lstm_prepared(x, *params)


def _lstm_reference(x, w_ih, w_hh, b_ih, b_hh):
    """Pure-JAX reference mirroring torch.nn.LSTM (single layer, zero init)."""
    T, B, D = x.shape
    H = w_hh.shape[1]

    def step(carry, x_t):
        h, c = carry
        gates = x_t @ w_ih.T + h @ w_hh.T + b_ih + b_hh
        i = jax.nn.sigmoid(gates[:, 0 * H:1 * H])
        f = jax.nn.sigmoid(gates[:, 1 * H:2 * H])
        g = jnp.tanh(gates[:, 2 * H:3 * H])
        o = jax.nn.sigmoid(gates[:, 3 * H:4 * H])
        c_new = f * c + i * g
        h_new = o * jnp.tanh(c_new)
        return (h_new, c_new), h_new

    init = (jnp.zeros((B, H), jnp.float32), jnp.zeros((B, H), jnp.float32))
    _, hs = lax.scan(step, init, x)
    return hs


if __name__ == "__main__":
    # Small shapes consistent with the module: seq=8, batch=2, input=32, hidden=32.
    T, B, D, H = 8, 2, 32, 32

    key = jax.random.PRNGKey(0)
    k_x, k_wih, k_whh, k_bih, k_bhh = jax.random.split(key, 5)

    # PyTorch-style init: U(-1/sqrt(H), 1/sqrt(H)), deterministic here.
    bound = 1.0 / jnp.sqrt(jnp.float32(H))
    x = jax.random.normal(k_x, (T, B, D), dtype=jnp.float32)
    w_ih = jax.random.uniform(k_wih, (4 * H, D), jnp.float32, -bound, bound)
    w_hh = jax.random.uniform(k_whh, (4 * H, H), jnp.float32, -bound, bound)
    b_ih = jax.random.uniform(k_bih, (4 * H,), jnp.float32, -bound, bound)
    b_hh = jax.random.uniform(k_bhh, (4 * H,), jnp.float32, -bound, bound)

    ref = _lstm_reference(x, w_ih, w_hh, b_ih, b_hh)

    # Default (bf16 MXU operands, f32 accumulation / gate math / cell state).
    # Parameters are prepared once (load-time), then the forward is called.
    prepped_bf16 = prepare_lstm_params(w_ih, w_hh, b_ih, b_hh, mxu_dtype=jnp.bfloat16)
    out_bf16 = jax.block_until_ready(gentle_push_late_lstm_prepared(x, *prepped_bf16))
    assert out_bf16.shape == (T, B, H)
    assert jnp.allclose(out_bf16, ref, atol=5e-2, rtol=5e-2), \
        "bf16 mismatch vs. reference LSTM"

    # f32 MXU-operand path (exact-ish vs. f32 reference; works on v5e/v6e/v7x).
    out_f32 = jax.block_until_ready(
        gentle_push_late_lstm(x, w_ih, w_hh, b_ih, b_hh, mxu_dtype=jnp.float32)
    )
    assert out_f32.shape == (T, B, H)
    assert jnp.allclose(out_f32, ref, atol=1e-4, rtol=1e-4), \
        "f32 mismatch vs. reference LSTM"

    print("KERNEL_OK")
</pallas_src>

<mosaic_0001>
module attributes {stable_mosaic.version = 11 : i64} {
  func.func @_lstm_kernel(%arg0: memref<16x32xbf16, #tpu.memory_space<vmem>>, %arg1: memref<32x128xbf16, #tpu.memory_space<vmem>>, %arg2: memref<32x128xbf16, #tpu.memory_space<vmem>>, %arg3: memref<1x128xf32, #tpu.memory_space<vmem>>, %arg4: memref<16x32xf32, #tpu.memory_space<vmem>>, %arg5: memref<16x128xf32, #tpu.memory_space<vmem>>) attributes {dimension_semantics = [], scalar_prefetch = 0 : i64, scratch_operands = 1 : i64, tpu.core_type = #tpu.core_type<tc>} {
    %c0 = arith.constant 0 : index
    %c0_0 = arith.constant 0 : index
    %0 = vector.load %arg0[%c0, %c0_0] : memref<16x32xbf16, #tpu.memory_space<vmem>>, vector<16x32xbf16>
    %c0_1 = arith.constant 0 : index
    %c0_2 = arith.constant 0 : index
    %1 = vector.load %arg1[%c0_1, %c0_2] : memref<32x128xbf16, #tpu.memory_space<vmem>>, vector<32x128xbf16>
    %cst = arith.constant dense<0.000000e+00> : vector<16x128xf32>
    %2 = tpu.matmul %0, %1, %cst {dimension_numbers = #tpu.dot_dimension_numbers<[1], [0], [0], [1], [0, 0, 1, 1], [], []>} : vector<16x32xbf16>, vector<32x128xbf16>, vector<16x128xf32> -> vector<16x128xf32>
    %c0_3 = arith.constant 0 : index
    %c0_4 = arith.constant 0 : index
    %3 = vector.load %arg3[%c0_3, %c0_4] : memref<1x128xf32, #tpu.memory_space<vmem>>, vector<1x128xf32>
    %4 = vector.broadcast %3 : vector<1x128xf32> to vector<16x128xf32>
    %5 = arith.addf %2, %4 : vector<16x128xf32>
    %c0_5 = arith.constant 0 : index
    %c0_6 = arith.constant 0 : index
    %6 = vector.load %arg5[%c0_5, %c0_6] : memref<16x128xf32, #tpu.memory_space<vmem>>, vector<16x128xf32>
    tpu.vector_store %arg5[%c0_5, %c0_6], %5 {strides = array<i32>} : memref<16x128xf32, #tpu.memory_space<vmem>>, vector<16x128xf32>,
    %cst_7 = arith.constant 0.000000e+00 : f32
    %7 = vector.broadcast %cst_7 : f32 to vector<2x32xf32>
    %cst_8 = arith.constant 0.000000e+00 : f32
    %8 = vector.broadcast %cst_8 : f32 to vector<2x32xf32>
    %c0_i32 = arith.constant 0 : i32
    %c2_i32 = arith.constant 2 : i32
    %9 = arith.muli %c0_i32, %c2_i32 : i32
    %10 = tpu.assume_multiple %9, 2 : i32
    %11 = arith.index_cast %10 : i32 to index
    %c0_9 = arith.constant 0 : index
    %12 = vector.load %arg5[%11, %c0_9] : memref<16x128xf32, #tpu.memory_space<vmem>>, vector<2x128xf32>
    %13 = arith.truncf %7 : vector<2x32xf32> to vector<2x32xbf16>
    %c0_10 = arith.constant 0 : index
    %c0_11 = arith.constant 0 : index
    %14 = vector.load %arg2[%c0_10, %c0_11] : memref<32x128xbf16, #tpu.memory_space<vmem>>, vector<32x128xbf16>
    %cst_12 = arith.constant dense<0.000000e+00> : vector<2x128xf32>
    %15 = tpu.matmul %13, %14, %cst_12 {dimension_numbers = #tpu.dot_dimension_numbers<[1], [0], [0], [1], [0, 0, 1, 1], [], []>} : vector<2x32xbf16>, vector<32x128xbf16>, vector<2x128xf32> -> vector<2x128xf32>
    %16 = arith.addf %12, %15 : vector<2x128xf32>
    %17 = arith.negf %16 : vector<2x128xf32>
    %18 = math.exp %17 : vector<2x128xf32>
    %cst_13 = arith.constant 1.000000e+00 : f32
    %19 = vector.broadcast %cst_13 : f32 to vector<2x128xf32>
    %20 = arith.addf %19, %18 : vector<2x128xf32>
    %21 = arith.divf %19, %20 : vector<2x128xf32>
    %22 = vector.extract_strided_slice %21 {offsets = [0, 0], sizes = [2, 32], strides = [1, 1]} : vector<2x128xf32> to vector<2x32xf32>
    %23 = vector.extract_strided_slice %21 {offsets = [0, 32], sizes = [2, 32], strides = [1, 1]} : vector<2x128xf32> to vector<2x32xf32>
    %24 = vector.extract_strided_slice %21 {offsets = [0, 64], sizes = [2, 32], strides = [1, 1]} : vector<2x128xf32> to vector<2x32xf32>
    %cst_14 = arith.constant 2.000000e+00 : f32
    %25 = vector.broadcast %cst_14 : f32 to vector<2x32xf32>
    %26 = arith.mulf %25, %24 : vector<2x32xf32>
    %cst_15 = arith.constant 1.000000e+00 : f32
    %27 = vector.broadcast %cst_15 : f32 to vector<2x32xf32>
    %28 = arith.subf %26, %27 : vector<2x32xf32>
    %29 = vector.extract_strided_slice %21 {offsets = [0, 96], sizes = [2, 32], strides = [1, 1]} : vector<2x128xf32> to vector<2x32xf32>
    %30 = arith.mulf %23, %8 : vector<2x32xf32>
    %31 = arith.mulf %22, %28 : vector<2x32xf32>
    %32 = arith.addf %30, %31 : vector<2x32xf32>
    %33 = math.tanh %32 : vector<2x32xf32>
    %34 = arith.mulf %29, %33 : vector<2x32xf32>
    %35 = arith.index_cast %10 : i32 to index
    %c0_16 = arith.constant 0 : index
    %36 = vector.load %arg4[%35, %c0_16] : memref<16x32xf32, #tpu.memory_space<vmem>>, vector<2x32xf32>
    tpu.vector_store %arg4[%35, %c0_16], %34 {strides = array<i32>} : memref<16x32xf32, #tpu.memory_space<vmem>>, vector<2x32xf32>,
    %c1_i32 = arith.constant 1 : i32
    %c2_i32_17 = arith.constant 2 : i32
    %37 = arith.muli %c1_i32, %c2_i32_17 : i32
    %38 = tpu.assume_multiple %37, 2 : i32
    %39 = arith.index_cast %38 : i32 to index
    %c0_18 = arith.constant 0 : index
    %40 = vector.load %arg5[%39, %c0_18] : memref<16x128xf32, #tpu.memory_space<vmem>>, vector<2x128xf32>
    %41 = arith.truncf %34 : vector<2x32xf32> to vector<2x32xbf16>
    %c0_19 = arith.constant 0 : index
    %c0_20 = arith.constant 0 : index
    %42 = vector.load %arg2[%c0_19, %c0_20] : memref<32x128xbf16, #tpu.memory_space<vmem>>, vector<32x128xbf16>
    %cst_21 = arith.constant dense<0.000000e+00> : vector<2x128xf32>
    %43 = tpu.matmul %41, %42, %cst_21 {dimension_numbers = #tpu.dot_dimension_numbers<[1], [0], [0], [1], [0, 0, 1, 1], [], []>} : vector<2x32xbf16>, vector<32x128xbf16>, vector<2x128xf32> -> vector<2x128xf32>
    %44 = arith.addf %40, %43 : vector<2x128xf32>
    %45 = arith.negf %44 : vector<2x128xf32>
    %46 = math.exp %45 : vector<2x128xf32>
    %cst_22 = arith.constant 1.000000e+00 : f32
    %47 = vector.broadcast %cst_22 : f32 to vector<2x128xf32>
    %48 = arith.addf %47, %46 : vector<2x128xf32>
    %49 = arith.divf %47, %48 : vector<2x128xf32>
    %50 = vector.extract_strided_slice %49 {offsets = [0, 0], sizes = [2, 32], strides = [1, 1]} : vector<2x128xf32> to vector<2x32xf32>
    %51 = vector.extract_strided_slice %49 {offsets = [0, 32], sizes = [2, 32], strides = [1, 1]} : vector<2x128xf32> to vector<2x32xf32>
    %52 = vector.extract_strided_slice %49 {offsets = [0, 64], sizes = [2, 32], strides = [1, 1]} : vector<2x128xf32> to vector<2x32xf32>
    %cst_23 = arith.constant 2.000000e+00 : f32
    %53 = vector.broadcast %cst_23 : f32 to vector<2x32xf32>
    %54 = arith.mulf %53, %52 : vector<2x32xf32>
    %cst_24 = arith.constant 1.000000e+00 : f32
    %55 = vector.broadcast %cst_24 : f32 to vector<2x32xf32>
    %56 = arith.subf %54, %55 : vector<2x32xf32>
    %57 = vector.extract_strided_slice %49 {offsets = [0, 96], sizes = [2, 32], strides = [1, 1]} : vector<2x128xf32> to vector<2x32xf32>
    %58 = arith.mulf %51, %32 : vector<2x32xf32>
    %59 = arith.mulf %50, %56 : vector<2x32xf32>
    %60 = arith.addf %58, %59 : vector<2x32xf32>
    %61 = math.tanh %60 : vector<2x32xf32>
    %62 = arith.mulf %57, %61 : vector<2x32xf32>
    %63 = arith.index_cast %38 : i32 to index
    %c0_25 = arith.constant 0 : index
    %64 = vector.load %arg4[%63, %c0_25] : memref<16x32xf32, #tpu.memory_space<vmem>>, vector<2x32xf32>
    tpu.vector_store %arg4[%63, %c0_25], %62 {strides = array<i32>} : memref<16x32xf32, #tpu.memory_space<vmem>>, vector<2x32xf32>,
    %c2_i32_26 = arith.constant 2 : i32
    %c2_i32_27 = arith.constant 2 : i32
    %65 = arith.muli %c2_i32_26, %c2_i32_27 : i32
    %66 = tpu.assume_multiple %65, 2 : i32
    %67 = arith.index_cast %66 : i32 to index
    %c0_28 = arith.constant 0 : index
    %68 = vector.load %arg5[%67, %c0_28] : memref<16x128xf32, #tpu.memory_space<vmem>>, vector<2x128xf32>
    %69 = arith.truncf %62 : vector<2x32xf32> to vector<2x32xbf16>
    %c0_29 = arith.constant 0 : index
    %c0_30 = arith.constant 0 : index
    %70 = vector.load %arg2[%c0_29, %c0_30] : memref<32x128xbf16, #tpu.memory_space<vmem>>, vector<32x128xbf16>
    %cst_31 = arith.constant dense<0.000000e+00> : vector<2x128xf32>
    %71 = tpu.matmul %69, %70, %cst_31 {dimension_numbers = #tpu.dot_dimension_numbers<[1], [0], [0], [1], [0, 0, 1, 1], [], []>} : vector<2x32xbf16>, vector<32x128xbf16>, vector<2x128xf32> -> vector<2x128xf32>
    %72 = arith.addf %68, %71 : vector<2x128xf32>
    %73 = arith.negf %72 : vector<2x128xf32>
    %74 = math.exp %73 : vector<2x128xf32>
    %cst_32 = arith.constant 1.000000e+00 : f32
    %75 = vector.broadcast %cst_32 : f32 to vector<2x128xf32>
    %76 = arith.addf %75, %74 : vector<2x128xf32>
    %77 = arith.divf %75, %76 : vector<2x128xf32>
    %78 = vector.extract_strided_slice %77 {offsets = [0, 0], sizes = [2, 32], strides = [1, 1]} : vector<2x128xf32> to vector<2x32xf32>
    %79 = vector.extract_strided_slice %77 {offsets = [0, 32], sizes = [2, 32], strides = [1, 1]} : vector<2x128xf32> to vector<2x32xf32>
    %80 = vector.extract_strided_slice %77 {offsets = [0, 64], sizes = [2, 32], strides = [1, 1]} : vector<2x128xf32> to vector<2x32xf32>
    %cst_33 = arith.constant 2.000000e+00 : f32
    %81 = vector.broadcast %cst_33 : f32 to vector<2x32xf32>
    %82 = arith.mulf %81, %80 : vector<2x32xf32>
    %cst_34 = arith.constant 1.000000e+00 : f32
    %83 = vector.broadcast %cst_34 : f32 to vector<2x32xf32>
    %84 = arith.subf %82, %83 : vector<2x32xf32>
    %85 = vector.extract_strided_slice %77 {offsets = [0, 96], sizes = [2, 32], strides = [1, 1]} : vector<2x128xf32> to vector<2x32xf32>
    %86 = arith.mulf %79, %60 : vector<2x32xf32>
    %87 = arith.mulf %78, %84 : vector<2x32xf32>
    %88 = arith.addf %86, %87 : vector<2x32xf32>
    %89 = math.tanh %88 : vector<2x32xf32>
    %90 = arith.mulf %85, %89 : vector<2x32xf32>
    %91 = arith.index_cast %66 : i32 to index
    %c0_35 = arith.constant 0 : index
    %92 = vector.load %arg4[%91, %c0_35] : memref<16x32xf32, #tpu.memory_space<vmem>>, vector<2x32xf32>
    tpu.vector_store %arg4[%91, %c0_35], %90 {strides = array<i32>} : memref<16x32xf32, #tpu.memory_space<vmem>>, vector<2x32xf32>,
    %c3_i32 = arith.constant 3 : i32
    %c2_i32_36 = arith.constant 2 : i32
    %93 = arith.muli %c3_i32, %c2_i32_36 : i32
    %94 = tpu.assume_multiple %93, 2 : i32
    %95 = arith.index_cast %94 : i32 to index
    %c0_37 = arith.constant 0 : index
    %96 = vector.load %arg5[%95, %c0_37] : memref<16x128xf32, #tpu.memory_space<vmem>>, vector<2x128xf32>
    %97 = arith.truncf %90 : vector<2x32xf32> to vector<2x32xbf16>
    %c0_38 = arith.constant 0 : index
    %c0_39 = arith.constant 0 : index
    %98 = vector.load %arg2[%c0_38, %c0_39] : memref<32x128xbf16, #tpu.memory_space<vmem>>, vector<32x128xbf16>
    %cst_40 = arith.constant dense<0.000000e+00> : vector<2x128xf32>
    %99 = tpu.matmul %97, %98, %cst_40 {dimension_numbers = #tpu.dot_dimension_numbers<[1], [0], [0], [1], [0, 0, 1, 1], [], []>} : vector<2x32xbf16>, vector<32x128xbf16>, vector<2x128xf32> -> vector<2x128xf32>
    %100 = arith.addf %96, %99 : vector<2x128xf32>
    %101 = arith.negf %100 : vector<2x128xf32>
    %102 = math.exp %101 : vector<2x128xf32>
    %cst_41 = arith.constant 1.000000e+00 : f32
    %103 = vector.broadcast %cst_41 : f32 to vector<2x128xf32>
    %104 = arith.addf %103, %102 : vector<2x128xf32>
    %105 = arith.divf %103, %104 : vector<2x128xf32>
    %106 = vector.extract_strided_slice %105 {offsets = [0, 0], sizes = [2, 32], strides = [1, 1]} : vector<2x128xf32> to vector<2x32xf32>
    %107 = vector.extract_strided_slice %105 {offsets = [0, 32], sizes = [2, 32], strides = [1, 1]} : vector<2x128xf32> to vector<2x32xf32>
    %108 = vector.extract_strided_slice %105 {offsets = [0, 64], sizes = [2, 32], strides = [1, 1]} : vector<2x128xf32> to vector<2x32xf32>
    %cst_42 = arith.constant 2.000000e+00 : f32
    %109 = vector.broadcast %cst_42 : f32 to vector<2x32xf32>
    %110 = arith.mulf %109, %108 : vector<2x32xf32>
    %cst_43 = arith.constant 1.000000e+00 : f32
    %111 = vector.broadcast %cst_43 : f32 to vector<2x32xf32>
    %112 = arith.subf %110, %111 : vector<2x32xf32>
    %113 = vector.extract_strided_slice %105 {offsets = [0, 96], sizes = [2, 32], strides = [1, 1]} : vector<2x128xf32> to vector<2x32xf32>
    %114 = arith.mulf %107, %88 : vector<2x32xf32>
    %115 = arith.mulf %106, %112 : vector<2x32xf32>
    %116 = arith.addf %114, %115 : vector<2x32xf32>
    %117 = math.tanh %116 : vector<2x32xf32>
    %118 = arith.mulf %113, %117 : vector<2x32xf32>
    %119 = arith.index_cast %94 : i32 to index
    %c0_44 = arith.constant 0 : index
    %120 = vector.load %arg4[%119, %c0_44] : memref<16x32xf32, #tpu.memory_space<vmem>>, vector<2x32xf32>
    tpu.vector_store %arg4[%119, %c0_44], %118 {strides = array<i32>} : memref<16x32xf32, #tpu.memory_space<vmem>>, vector<2x32xf32>,
    %c4_i32 = arith.constant 4 : i32
    %c2_i32_45 = arith.constant 2 : i32
    %121 = arith.muli %c4_i32, %c2_i32_45 : i32
    %122 = tpu.assume_multiple %121, 2 : i32
    %123 = arith.index_cast %122 : i32 to index
    %c0_46 = arith.constant 0 : index
    %124 = vector.load %arg5[%123, %c0_46] : memref<16x128xf32, #tpu.memory_space<vmem>>, vector<2x128xf32>
    %125 = arith.truncf %118 : vector<2x32xf32> to vector<2x32xbf16>
    %c0_47 = arith.constant 0 : index
    %c0_48 = arith.constant 0 : index
    %126 = vector.load %arg2[%c0_47, %c0_48] : memref<32x128xbf16, #tpu.memory_space<vmem>>, vector<32x128xbf16>
    %cst_49 = arith.constant dense<0.000000e+00> : vector<2x128xf32>
    %127 = tpu.matmul %125, %126, %cst_49 {dimension_numbers = #tpu.dot_dimension_numbers<[1], [0], [0], [1], [0, 0, 1, 1], [], []>} : vector<2x32xbf16>, vector<32x128xbf16>, vector<2x128xf32> -> vector<2x128xf32>
    %128 = arith.addf %124, %127 : vector<2x128xf32>
    %129 = arith.negf %128 : vector<2x128xf32>
    %130 = math.exp %129 : vector<2x128xf32>
    %cst_50 = arith.constant 1.000000e+00 : f32
    %131 = vector.broadcast %cst_50 : f32 to vector<2x128xf32>
    %132 = arith.addf %131, %130 : vector<2x128xf32>
    %133 = arith.divf %131, %132 : vector<2x128xf32>
    %134 = vector.extract_strided_slice %133 {offsets = [0, 0], sizes = [2, 32], strides = [1, 1]} : vector<2x128xf32> to vector<2x32xf32>
    %135 = vector.extract_strided_slice %133 {offsets = [0, 32], sizes = [2, 32], strides = [1, 1]} : vector<2x128xf32> to vector<2x32xf32>
    %136 = vector.extract_strided_slice %133 {offsets = [0, 64], sizes = [2, 32], strides = [1, 1]} : vector<2x128xf32> to vector<2x32xf32>
    %cst_51 = arith.constant 2.000000e+00 : f32
    %137 = vector.broadcast %cst_51 : f32 to vector<2x32xf32>
    %138 = arith.mulf %137, %136 : vector<2x32xf32>
    %cst_52 = arith.constant 1.000000e+00 : f32
    %139 = vector.broadcast %cst_52 : f32 to vector<2x32xf32>
    %140 = arith.subf %138, %139 : vector<2x32xf32>
    %141 = vector.extract_strided_slice %133 {offsets = [0, 96], sizes = [2, 32], strides = [1, 1]} : vector<2x128xf32> to vector<2x32xf32>
    %142 = arith.mulf %135, %116 : vector<2x32xf32>
    %143 = arith.mulf %134, %140 : vector<2x32xf32>
    %144 = arith.addf %142, %143 : vector<2x32xf32>
    %145 = math.tanh %144 : vector<2x32xf32>
    %146 = arith.mulf %141, %145 : vector<2x32xf32>
    %147 = arith.index_cast %122 : i32 to index
    %c0_53 = arith.constant 0 : index
    %148 = vector.load %arg4[%147, %c0_53] : memref<16x32xf32, #tpu.memory_space<vmem>>, vector<2x32xf32>
    tpu.vector_store %arg4[%147, %c0_53], %146 {strides = array<i32>} : memref<16x32xf32, #tpu.memory_space<vmem>>, vector<2x32xf32>,
    %c5_i32 = arith.constant 5 : i32
    %c2_i32_54 = arith.constant 2 : i32
    %149 = arith.muli %c5_i32, %c2_i32_54 : i32
    %150 = tpu.assume_multiple %149, 2 : i32
    %151 = arith.index_cast %150 : i32 to index
    %c0_55 = arith.constant 0 : index
    %152 = vector.load %arg5[%151, %c0_55] : memref<16x128xf32, #tpu.memory_space<vmem>>, vector<2x128xf32>
    %153 = arith.truncf %146 : vector<2x32xf32> to vector<2x32xbf16>
    %c0_56 = arith.constant 0 : index
    %c0_57 = arith.constant 0 : index
    %154 = vector.load %arg2[%c0_56, %c0_57] : memref<32x128xbf16, #tpu.memory_space<vmem>>, vector<32x128xbf16>
    %cst_58 = arith.constant dense<0.000000e+00> : vector<2x128xf32>
    %155 = tpu.matmul %153, %154, %cst_58 {dimension_numbers = #tpu.dot_dimension_numbers<[1], [0], [0], [1], [0, 0, 1, 1], [], []>} : vector<2x32xbf16>, vector<32x128xbf16>, vector<2x128xf32> -> vector<2x128xf32>
    %156 = arith.addf %152, %155 : vector<2x128xf32>
    %157 = arith.negf %156 : vector<2x128xf32>
    %158 = math.exp %157 : vector<2x128xf32>
    %cst_59 = arith.constant 1.000000e+00 : f32
    %159 = vector.broadcast %cst_59 : f32 to vector<2x128xf32>
    %160 = arith.addf %159, %158 : vector<2x128xf32>
    %161 = arith.divf %159, %160 : vector<2x128xf32>
    %162 = vector.extract_strided_slice %161 {offsets = [0, 0], sizes = [2, 32], strides = [1, 1]} : vector<2x128xf32> to vector<2x32xf32>
    %163 = vector.extract_strided_slice %161 {offsets = [0, 32], sizes = [2, 32], strides = [1, 1]} : vector<2x128xf32> to vector<2x32xf32>
    %164 = vector.extract_strided_slice %161 {offsets = [0, 64], sizes = [2, 32], strides = [1, 1]} : vector<2x128xf32> to vector<2x32xf32>
    %cst_60 = arith.constant 2.000000e+00 : f32
    %165 = vector.broadcast %cst_60 : f32 to vector<2x32xf32>
    %166 = arith.mulf %165, %164 : vector<2x32xf32>
    %cst_61 = arith.constant 1.000000e+00 : f32
    %167 = vector.broadcast %cst_61 : f32 to vector<2x32xf32>
    %168 = arith.subf %166, %167 : vector<2x32xf32>
    %169 = vector.extract_strided_slice %161 {offsets = [0, 96], sizes = [2, 32], strides = [1, 1]} : vector<2x128xf32> to vector<2x32xf32>
    %170 = arith.mulf %163, %144 : vector<2x32xf32>
    %171 = arith.mulf %162, %168 : vector<2x32xf32>
    %172 = arith.addf %170, %171 : vector<2x32xf32>
    %173 = math.tanh %172 : vector<2x32xf32>
    %174 = arith.mulf %169, %173 : vector<2x32xf32>
    %175 = arith.index_cast %150 : i32 to index
    %c0_62 = arith.constant 0 : index
    %176 = vector.load %arg4[%175, %c0_62] : memref<16x32xf32, #tpu.memory_space<vmem>>, vector<2x32xf32>
    tpu.vector_store %arg4[%175, %c0_62], %174 {strides = array<i32>} : memref<16x32xf32, #tpu.memory_space<vmem>>, vector<2x32xf32>,
    %c6_i32 = arith.constant 6 : i32
    %c2_i32_63 = arith.constant 2 : i32
    %177 = arith.muli %c6_i32, %c2_i32_63 : i32
    %178 = tpu.assume_multiple %177, 2 : i32
    %179 = arith.index_cast %178 : i32 to index
    %c0_64 = arith.constant 0 : index
    %180 = vector.load %arg5[%179, %c0_64] : memref<16x128xf32, #tpu.memory_space<vmem>>, vector<2x128xf32>
    %181 = arith.truncf %174 : vector<2x32xf32> to vector<2x32xbf16>
    %c0_65 = arith.constant 0 : index
    %c0_66 = arith.constant 0 : index
    %182 = vector.load %arg2[%c0_65, %c0_66] : memref<32x128xbf16, #tpu.memory_space<vmem>>, vector<32x128xbf16>
    %cst_67 = arith.constant dense<0.000000e+00> : vector<2x128xf32>
    %183 = tpu.matmul %181, %182, %cst_67 {dimension_numbers = #tpu.dot_dimension_numbers<[1], [0], [0], [1], [0, 0, 1, 1], [], []>} : vector<2x32xbf16>, vector<32x128xbf16>, vector<2x128xf32> -> vector<2x128xf32>
    %184 = arith.addf %180, %183 : vector<2x128xf32>
    %185 = arith.negf %184 : vector<2x128xf32>
    %186 = math.exp %185 : vector<2x128xf32>
    %cst_68 = arith.constant 1.000000e+00 : f32
    %187 = vector.broadcast %cst_68 : f32 to vector<2x128xf32>
    %188 = arith.addf %187, %186 : vector<2x128xf32>
    %189 = arith.divf %187, %188 : vector<2x128xf32>
    %190 = vector.extract_strided_slice %189 {offsets = [0, 0], sizes = [2, 32], strides = [1, 1]} : vector<2x128xf32> to vector<2x32xf32>
    %191 = vector.extract_strided_slice %189 {offsets = [0, 32], sizes = [2, 32], strides = [1, 1]} : vector<2x128xf32> to vector<2x32xf32>
    %192 = vector.extract_strided_slice %189 {offsets = [0, 64], sizes = [2, 32], strides = [1, 1]} : vector<2x128xf32> to vector<2x32xf32>
    %cst_69 = arith.constant 2.000000e+00 : f32
    %193 = vector.broadcast %cst_69 : f32 to vector<2x32xf32>
    %194 = arith.mulf %193, %192 : vector<2x32xf32>
    %cst_70 = arith.constant 1.000000e+00 : f32
    %195 = vector.broadcast %cst_70 : f32 to vector<2x32xf32>
    %196 = arith.subf %194, %195 : vector<2x32xf32>
    %197 = vector.extract_strided_slice %189 {offsets = [0, 96], sizes = [2, 32], strides = [1, 1]} : vector<2x128xf32> to vector<2x32xf32>
    %198 = arith.mulf %191, %172 : vector<2x32xf32>
    %199 = arith.mulf %190, %196 : vector<2x32xf32>
    %200 = arith.addf %198, %199 : vector<2x32xf32>
    %201 = math.tanh %200 : vector<2x32xf32>
    %202 = arith.mulf %197, %201 : vector<2x32xf32>
    %203 = arith.index_cast %178 : i32 to index
    %c0_71 = arith.constant 0 : index
    %204 = vector.load %arg4[%203, %c0_71] : memref<16x32xf32, #tpu.memory_space<vmem>>, vector<2x32xf32>
    tpu.vector_store %arg4[%203, %c0_71], %202 {strides = array<i32>} : memref<16x32xf32, #tpu.memory_space<vmem>>, vector<2x32xf32>,
    %c7_i32 = arith.constant 7 : i32
    %c2_i32_72 = arith.constant 2 : i32
    %205 = arith.muli %c7_i32, %c2_i32_72 : i32
    %206 = tpu.assume_multiple %205, 2 : i32
    %207 = arith.index_cast %206 : i32 to index
    %c0_73 = arith.constant 0 : index
    %208 = vector.load %arg5[%207, %c0_73] : memref<16x128xf32, #tpu.memory_space<vmem>>, vector<2x128xf32>
    %209 = arith.truncf %202 : vector<2x32xf32> to vector<2x32xbf16>
    %c0_74 = arith.constant 0 : index
    %c0_75 = arith.constant 0 : index
    %210 = vector.load %arg2[%c0_74, %c0_75] : memref<32x128xbf16, #tpu.memory_space<vmem>>, vector<32x128xbf16>
    %cst_76 = arith.constant dense<0.000000e+00> : vector<2x128xf32>
    %211 = tpu.matmul %209, %210, %cst_76 {dimension_numbers = #tpu.dot_dimension_numbers<[1], [0], [0], [1], [0, 0, 1, 1], [], []>} : vector<2x32xbf16>, vector<32x128xbf16>, vector<2x128xf32> -> vector<2x128xf32>
    %212 = arith.addf %208, %211 : vector<2x128xf32>
    %213 = arith.negf %212 : vector<2x128xf32>
    %214 = math.exp %213 : vector<2x128xf32>
    %cst_77 = arith.constant 1.000000e+00 : f32
    %215 = vector.broadcast %cst_77 : f32 to vector<2x128xf32>
    %216 = arith.addf %215, %214 : vector<2x128xf32>
    %217 = arith.divf %215, %216 : vector<2x128xf32>
    %218 = vector.extract_strided_slice %217 {offsets = [0, 0], sizes = [2, 32], strides = [1, 1]} : vector<2x128xf32> to vector<2x32xf32>
    %219 = vector.extract_strided_slice %217 {offsets = [0, 32], sizes = [2, 32], strides = [1, 1]} : vector<2x128xf32> to vector<2x32xf32>
    %220 = vector.extract_strided_slice %217 {offsets = [0, 64], sizes = [2, 32], strides = [1, 1]} : vector<2x128xf32> to vector<2x32xf32>
    %cst_78 = arith.constant 2.000000e+00 : f32
    %221 = vector.broadcast %cst_78 : f32 to vector<2x32xf32>
    %222 = arith.mulf %221, %220 : vector<2x32xf32>
    %cst_79 = arith.constant 1.000000e+00 : f32
    %223 = vector.broadcast %cst_79 : f32 to vector<2x32xf32>
    %224 = arith.subf %222, %223 : vector<2x32xf32>
    %225 = vector.extract_strided_slice %217 {offsets = [0, 96], sizes = [2, 32], strides = [1, 1]} : vector<2x128xf32> to vector<2x32xf32>
    %226 = arith.mulf %219, %200 : vector<2x32xf32>
    %227 = arith.mulf %218, %224 : vector<2x32xf32>
    %228 = arith.addf %226, %227 : vector<2x32xf32>
    %229 = math.tanh %228 : vector<2x32xf32>
    %230 = arith.mulf %225, %229 : vector<2x32xf32>
    %231 = arith.index_cast %206 : i32 to index
    %c0_80 = arith.constant 0 : index
    %232 = vector.load %arg4[%231, %c0_80] : memref<16x32xf32, #tpu.memory_space<vmem>>, vector<2x32xf32>
    tpu.vector_store %arg4[%231, %c0_80], %230 {strides = array<i32>} : memref<16x32xf32, #tpu.memory_space<vmem>>, vector<2x32xf32>,
    %c8_i32 = arith.constant 8 : i32
    return
  }
}

</mosaic_0001>

<llo_original>
// kernel: tpu_custom_call.1
$region0: #{tpu_custom_call.1}
  #allocation0 [shape = 'u32[]', space=smem, size = 0x4, offset = 0x4, fixed_abs, tag = 'smem constant byte address 0x4 - core index']
  #allocation1 [shape = 'u32[144,128]{1,0:T(1,128)}', space=vmem, size = 0x12000, scoped, tag = 'internal scratch']
  #allocation2 [shape = 'f32[16,128]{1,0:T(8,128)}', space=vmem, size = 0x2000, scoped, tag = 'scratch operand']
  %s0 = inlined_call_operand.hbm [shape: bf16[16,32], index: 0, kind: input, shape index: {}]
  %s1 = inlined_call_operand.hbm [shape: bf16[32,128], index: 1, kind: input, shape index: {}]
  %s2 = inlined_call_operand.hbm [shape: bf16[32,128], index: 2, kind: input, shape index: {}]
  %s3 = inlined_call_operand.vmem [shape: f32[1,128], index: 3, kind: input, shape index: {}]
  %s4 = inlined_call_operand.hbm [shape: f32[16,32], index: 4, kind: output, shape index: {}]
  %s5 = sld [smem:[#allocation0]]
  $region38: #{tpu_custom_call.1} parent=0
    _
  %s7 = ssub.s32 1, %s5
  %s8 = scalar_select 0, %s7, %s5
  $region1: #{tpu_custom_call.1} parent=0
    #allocation3 [shape = 'u8[4096]{0}', space=vmem, size = 0x1000, scoped, tag = 'input window, operand 0, single buffered']
    #allocation4 [shape = 's32[1]{0}', space=sflag, size = 0x4, scoped, tag = 'scoped memory for tpu_custom_call.1']
    #allocation5 [shape = 's32[1]{0}', space=sflag, size = 0x4, scoped, tag = 'scoped memory for tpu_custom_call.1']
    #allocation6 [shape = 'u8[8192]{0}', space=vmem, size = 0x2000, scoped, tag = 'input window, operand 1, single buffered']
    #allocation7 [shape = 's32[1]{0}', space=sflag, size = 0x4, scoped, tag = 'scoped memory for tpu_custom_call.1']
    #allocation8 [shape = 'u8[8192]{0}', space=vmem, size = 0x2000, scoped, tag = 'input window, operand 2, single buffered']
    #allocation9 [shape = 'u8[8192]{0}', space=vmem, size = 0x2000, scoped, tag = 'output window, operand 0, single buffered']
    %9 = vsyncpa [#allocation4], 0
    %10 = vsyncpa [#allocation7], 0
    %11 = vsyncpa [#allocation5], 0
    // Predicated region
    $region2: #{tpu_custom_call.1} parent=1 // pred_check
      _
    $region3: #{tpu_custom_call.1} parent=1 // pred_check_branch
      %13 = sbr.rel (0) target = $region5
    $region4: #{tpu_custom_call.1} parent=1 // pred_region
      %s15 = ssub.s32 128, 128
      %16 = vsyncadd [#allocation4], %s15
      %s17 = sshll.u32 [#allocation3], 4
      %s18 = int_to_ptr.vmem [resolvable:$true] %s17
      %23 = dma.hbm_to_vmem [thread:$0]  %s0, 128, %s18, [#allocation4], 64, 64, 4
    $region5: #{tpu_custom_call.1} parent=1 // pred_fallthru
      _
    // Predicated region
    $region6: #{tpu_custom_call.1} parent=1 // pred_check
      _
    $region7: #{tpu_custom_call.1} parent=1 // pred_check_branch
      %25 = sbr.rel (0) target = $region9
    $region8: #{tpu_custom_call.1} parent=1 // pred_region
      %s27 = ssub.s32 256, 256
      %28 = vsyncadd [#allocation7], %s27
      %s29 = sshll.u32 [#allocation6], 4
      %s30 = int_to_ptr.vmem [resolvable:$true] %s29
      %35 = dma.hbm_to_vmem [thread:$0]  %s1, 256, %s30, [#allocation7], 64, 64, 4
    $region9: #{tpu_custom_call.1} parent=1 // pred_fallthru
      _
    // Predicated region
    $region10: #{tpu_custom_call.1} parent=1 // pred_check
      _
    $region11: #{tpu_custom_call.1} parent=1 // pred_check_branch
      %37 = sbr.rel (0) target = $region13
    $region12: #{tpu_custom_call.1} parent=1 // pred_region
      %s39 = ssub.s32 256, 256
      %40 = vsyncadd [#allocation7], %s39
      %s41 = sshll.u32 [#allocation8], 4
      %s42 = int_to_ptr.vmem [resolvable:$true] %s41
      %47 = dma.hbm_to_vmem [thread:$0]  %s2, 256, %s42, [#allocation7], 64, 64, 4
    $region13: #{tpu_custom_call.1} parent=1 // pred_fallthru
      _
    // Predicated region
    $region14: #{tpu_custom_call.1} parent=1 // pred_check
      _
    $region15: #{tpu_custom_call.1} parent=1 // pred_check_branch
      %49 = sbr.rel (0) target = $region17
    $region16: #{tpu_custom_call.1} parent=1 // pred_region
      _
    $region17: #{tpu_custom_call.1} parent=1 // pred_fallthru
      _
    // Predicated region
    $region18: #{tpu_custom_call.1} parent=1 // pred_check
      _
    $region19: #{tpu_custom_call.1} parent=1 // pred_check_branch
      %51 = sbr.rel (0) target = $region21
    $region20: #{tpu_custom_call.1} parent=1 // pred_region
      %52 = dma.done [#allocation4], 128
    $region21: #{tpu_custom_call.1} parent=1 // pred_fallthru
      _
    // Predicated region
    $region22: #{tpu_custom_call.1} parent=1 // pred_check
      _
    $region23: #{tpu_custom_call.1} parent=1 // pred_check_branch
      %54 = sbr.rel (0) target = $region25
    $region24: #{tpu_custom_call.1} parent=1 // pred_region
      %55 = dma.done [#allocation7], 256
    $region25: #{tpu_custom_call.1} parent=1 // pred_fallthru
      _
    // Predicated region
    $region26: #{tpu_custom_call.1} parent=1 // pred_check
      _
    $region27: #{tpu_custom_call.1} parent=1 // pred_check_branch
      %57 = sbr.rel (0) target = $region29
    $region28: #{tpu_custom_call.1} parent=1 // pred_region
      %58 = dma.done [#allocation7], 256
    $region29: #{tpu_custom_call.1} parent=1 // pred_fallthru
      _
    %v60 = vld [vmem:[#allocation3] sm:$0xf]
    %v61 = vld [vmem:[#allocation3 + $0x4] sm:$0xf]
    %v62 = vld [vmem:[#allocation6] sm:$0xf]
    %v63 = vld [vmem:[#allocation6 + $0x4] sm:$0xf]
    %v64 = vld [vmem:[#allocation6 + $0x8] sm:$0xf]
    %v65 = vld [vmem:[#allocation6 + $0xc] sm:$0xf]
    %v66 = vld [vmem:[%s3] sm:$0x1]
    %v68 = vlaneseq
    %v69 = vshrl.u32 %v68, 7
    %v70 = vsub.s32 0, %v69
    %v71 = vrot.slane %v66, %v70
    %v75 = vunpack.c.l.b16 %v60
    %v76 = vunpack.c.l.b16 %v61
    %v77 = vpack.c.b16 %v76, %v75
    %v82 = vunpack.c.l.b16 %v62
    %v83 = vunpack.c.l.b16 %v63
    %v84 = vunpack.c.l.b16 %v64
    %v85 = vunpack.c.l.b16 %v65
    %v86 = vpack.c.b16 %v83, %v82
    %v87 = vpack.c.b16 %v85, %v84
    %vm90 = vcmask 261120
    %v92 = vsel %vm90, %v77, 0
    %94 = vmatprep.subr.bf16.mxu0 0
    %95 = vmatpush1.bf16.msra.mxu0 %v86
    %96 = vmatprep.subr.bf16.mxu0 0
    %97 = vmatpush1.bf16.msra.mxu0 %v87
    %98 = vmatprep.subr.bf16.mxu0 0
    %99 = vmatpush1.bf16.msra.mxu0 0
    %100 = vmatprep.subr.bf16.mxu0 0
    %101 = vmatpush1.bf16.msra.mxu0 0
    %102 = vmatprep.subr.bf16.mxu0 0
    %103 = vmatpush1.bf16.msra.mxu0 0
    %104 = vmatprep.subr.bf16.mxu0 0
    %105 = vmatpush1.bf16.msra.mxu0 0
    %106 = vmatprep.subr.bf16.mxu0 0
    %107 = vmatpush1.bf16.msra.mxu0 0
    %108 = vmatprep.subr.bf16.mxu0 0
    %109 = vmatpush1.bf16.msra.mxu0 0
    %110 = vmatprep.subr.bf16.mxu0 0
    %111 = vmatpush1.bf16.msra.mxu0 0
    %112 = vmatprep.subr.bf16.mxu0 0
    %113 = vmatpush1.bf16.msra.mxu0 0
    %114 = vmatprep.subr.bf16.mxu0 0
    %115 = vmatpush1.bf16.msra.mxu0 0
    %116 = vmatprep.subr.bf16.mxu0 0
    %117 = vmatpush1.bf16.msra.mxu0 0
    %118 = vmatprep.subr.bf16.mxu0 0
    %119 = vmatpush1.bf16.msra.mxu0 0
    %120 = vmatprep.subr.bf16.mxu0 0
    %121 = vmatpush1.bf16.msra.mxu0 0
    %122 = vmatprep.subr.bf16.mxu0 0
    %123 = vmatpush1.bf16.msra.mxu0 0
    %124 = vmatprep.subr.bf16.mxu0 0
    %125 = vmatpush1.bf16.msra.mxu0 0
    %126 = vmatprep.mubr.bf16.mxu0 0
    %127 = vmatmul.mubr.bf16.gmra.mrb[0].mxu0 %v92
    %v128 = vpop.f32.mrb[0].mxu0
    %v129 = vadd.f32 %v71, %v128
    %v130 = vpop.f32.mrb[0].mxu0
    %v131 = vpop.f32.mrb[0].mxu0
    %v132 = vadd.f32 %v71, %v131
    %v133 = vpop.f32.mrb[0].mxu0
    %134 = vdwg.mxu0
    %135 = vst [vmem:[#allocation2] sm:$0xff] %v129
    %136 = vst [vmem:[#allocation2 + $0x8] sm:$0xff] %v132
    %v137 = vld [vmem:[#allocation2] sm:$0x3]
    %v138 = vld [vmem:[#allocation8] sm:$0xf]
    %v139 = vld [vmem:[#allocation8 + $0x4] sm:$0xf]
    %v140 = vld [vmem:[#allocation8 + $0x8] sm:$0xf]
    %v141 = vld [vmem:[#allocation8 + $0xc] sm:$0xf]
    %v146 = vunpack.c.l.b16 %v138
    %v147 = vunpack.c.l.b16 %v139
    %v148 = vunpack.c.l.b16 %v140
    %v149 = vunpack.c.l.b16 %v141
    %v150 = vpack.c.b16 %v147, %v146
    %v151 = vpack.c.b16 %v149, %v148
    %v155 = vsel %vm90, 0, 0
    %157 = vmatprep.subr.bf16.mxu0 0
    %158 = vmatpush1.bf16.msra.mxu0 %v150
    %159 = vmatprep.subr.bf16.mxu0 0
    %160 = vmatpush1.bf16.msra.mxu0 %v151
    %161 = vmatprep.subr.bf16.mxu0 0
    %162 = vmatpush1.bf16.msra.mxu0 0
    %163 = vmatprep.subr.bf16.mxu0 0
    %164 = vmatpush1.bf16.msra.mxu0 0
    %165 = vmatprep.subr.bf16.mxu0 0
    %166 = vmatpush1.bf16.msra.mxu0 0
    %167 = vmatprep.subr.bf16.mxu0 0
    %168 = vmatpush1.bf16.msra.mxu0 0
    %169 = vmatprep.subr.bf16.mxu0 0
    %170 = vmatpush1.bf16.msra.mxu0 0
    %171 = vmatprep.subr.bf16.mxu0 0
    %172 = vmatpush1.bf16.msra.mxu0 0
    %173 = vmatprep.subr.bf16.mxu0 0
    %174 = vmatpush1.bf16.msra.mxu0 0
    %175 = vmatprep.subr.bf16.mxu0 0
    %176 = vmatpush1.bf16.msra.mxu0 0
    %177 = vmatprep.subr.bf16.mxu0 0
    %178 = vmatpush1.bf16.msra.mxu0 0
    %179 = vmatprep.subr.bf16.mxu0 0
    %180 = vmatpush1.bf16.msra.mxu0 0
    %181 = vmatprep.subr.bf16.mxu0 0
    %182 = vmatpush1.bf16.msra.mxu0 0
    %183 = vmatprep.subr.bf16.mxu0 0
    %184 = vmatpush1.bf16.msra.mxu0 0
    %185 = vmatprep.subr.bf16.mxu0 0
    %186 = vmatpush1.bf16.msra.mxu0 0
    %187 = vmatprep.subr.bf16.mxu0 0
    %188 = vmatpush1.bf16.msra.mxu0 0
    %189 = vmatprep.mubr.bf16.mxu0 0
    %190 = vmatmul.mubr.bf16.gmra.mrb[0].mxu0 %v155
    %v191 = vpop.f32.mrb[0].mxu0
    %v192 = vadd.f32 0.0, %v191
    %v193 = vpop.f32.mrb[0].mxu0
    %v194 = vpop.f32.mrb[0].mxu0
    %v195 = vpop.f32.mrb[0].mxu0
    %196 = vdwg.mxu0
    %v197 = vadd.f32 %v137, %v192
    %v198 = vxor.u32 %v197, 2147483648
    %v199 = vmul.f32 %v198, 1.442695
    %v200 = vpow.pop %v199
    %v201 = vadd.f32 %v200, 1.0
    %v202 = vrcp.pop %v201
    %v203 = vmul.f32 1.0, %v202
    %v204 = vmul.f32 %v203, 2.0
    %v205 = vsub.f32 %v204, 1.0
    %v206 = vmul.f32 %v203, 0.0
    %208 = vrot.lane.b32.xlu0 %v205, 64
    %v209 = vpop.permute.xlu0 %208
    %v211 = vmul.f32 %v203, %v209
    %213 = vrot.lane.b32.xlu0 %v211, 32
    %v214 = vpop.permute.xlu0 %213
    %v216 = vadd.f32 %v206, %v214
    %v217 = vtanh.pop %v216
    %219 = vrot.lane.b32.xlu0 %v217, 64
    %v220 = vpop.permute.xlu0 %219
    %v222 = vmul.f32 %v203, %v220
    %224 = vrot.lane.b32.xlu0 %v222, 32
    %v225 = vpop.permute.xlu0 %224
    %vm227 = vcmask 254976
    %228 = vst.msk [vmem:[#allocation9] sm:$0x3] %vm227, %v225
    %s229 = scalar_lea.vmem [#allocation2], 2
    %v230 = vld [vmem:[%s229] sm:$0x3]
    %v231 = vpack.c.bf16 %v222, %v222
    %v232 = vld [vmem:[#allocation8] sm:$0xf]
    %v233 = vld [vmem:[#allocation8 + $0x4] sm:$0xf]
    %v234 = vld [vmem:[#allocation8 + $0x8] sm:$0xf]
    %v235 = vld [vmem:[#allocation8 + $0xc] sm:$0xf]
    %237 = vrot.lane.b32.xlu0 %v231, 32
    %v238 = vpop.permute.xlu0 %237
    %v243 = vunpack.c.l.b16 %v232
    %v244 = vunpack.c.l.b16 %v233
    %v245 = vunpack.c.l.b16 %v234
    %v246 = vunpack.c.l.b16 %v235
    %v247 = vpack.c.b16 %v244, %v243
    %v248 = vpack.c.b16 %v246, %v245
    %v252 = vsel %vm90, %v238, 0
    %254 = vmatprep.subr.bf16.mxu0 0
    %255 = vmatpush1.bf16.msra.mxu0 %v247
    %256 = vmatprep.subr.bf16.mxu0 0
    %257 = vmatpush1.bf16.msra.mxu0 %v248
    %258 = vmatprep.subr.bf16.mxu0 0
    %259 = vmatpush1.bf16.msra.mxu0 0
    %260 = vmatprep.subr.bf16.mxu0 0
    %261 = vmatpush1.bf16.msra.mxu0 0
    %262 = vmatprep.subr.bf16.mxu0 0
    %263 = vmatpush1.bf16.msra.mxu0 0
    %264 = vmatprep.subr.bf16.mxu0 0
    %265 = vmatpush1.bf16.msra.mxu0 0
    %266 = vmatprep.subr.bf16.mxu0 0
    %267 = vmatpush1.bf16.msra.mxu0 0
    %268 = vmatprep.subr.bf16.mxu0 0
    %269 = vmatpush1.bf16.msra.mxu0 0
    %270 = vmatprep.subr.bf16.mxu0 0
    %271 = vmatpush1.bf16.msra.mxu0 0
    %272 = vmatprep.subr.bf16.mxu0 0
    %273 = vmatpush1.bf16.msra.mxu0 0
    %274 = vmatprep.subr.bf16.mxu0 0
    %275 = vmatpush1.bf16.msra.mxu0 0
    %276 = vmatprep.subr.bf16.mxu0 0
    %277 = vmatpush1.bf16.msra.mxu0 0
    %278 = vmatprep.subr.bf16.mxu0 0
    %279 = vmatpush1.bf16.msra.mxu0 0
    %280 = vmatprep.subr.bf16.mxu0 0
    %281 = vmatpush1.bf16.msra.mxu0 0
    %282 = vmatprep.subr.bf16.mxu0 0
    %283 = vmatpush1.bf16.msra.mxu0 0
    %284 = vmatprep.subr.bf16.mxu0 0
    %285 = vmatpush1.bf16.msra.mxu0 0
    %286 = vmatprep.mubr.bf16.mxu0 0
    %287 = vmatmul.mubr.bf16.gmra.mrb[0].mxu0 %v252
    %v288 = vpop.f32.mrb[0].mxu0
    %v289 = vadd.f32 0.0, %v288
    %v290 = vpop.f32.mrb[0].mxu0
    %v291 = vpop.f32.mrb[0].mxu0
    %v292 = vpop.f32.mrb[0].mxu0
    %293 = vdwg.mxu0
    %v294 = vadd.f32 %v230, %v289
    %v295 = vxor.u32 %v294, 2147483648
    %v296 = vmul.f32 %v295, 1.442695
    %v297 = vpow.pop %v296
    %v298 = vadd.f32 %v297, 1.0
    %v299 = vrcp.pop %v298
    %v300 = vmul.f32 1.0, %v299
    %v301 = vmul.f32 %v300, 2.0
    %v302 = vsub.f32 %v301, 1.0
    %v303 = vmul.f32 %v300, %v216
    %305 = vrot.lane.b32.xlu0 %v302, 64
    %v306 = vpop.permute.xlu0 %305
    %v308 = vmul.f32 %v300, %v306
    %310 = vrot.lane.b32.xlu0 %v308, 32
    %v311 = vpop.permute.xlu0 %310
    %v313 = vadd.f32 %v303, %v311
    %v314 = vtanh.pop %v313
    %316 = vrot.lane.b32.xlu0 %v314, 64
    %v317 = vpop.permute.xlu0 %316
    %v319 = vmul.f32 %v300, %v317
    %321 = vrot.lane.b32.xlu0 %v319, 32
    %v322 = vpop.permute.xlu0 %321
    %s324 = scalar_lea.vmem [#allocation9], 2
    %325 = vst.msk [vmem:[%s324] sm:$0x3] %vm227, %v322
    %s326 = scalar_lea.vmem [#allocation2], 4
    %v327 = vld [vmem:[%s326] sm:$0x3]
    %v328 = vpack.c.bf16 %v319, %v319
    %v329 = vld [vmem:[#allocation8] sm:$0xf]
    %v330 = vld [vmem:[#allocation8 + $0x4] sm:$0xf]
    %v331 = vld [vmem:[#allocation8 + $0x8] sm:$0xf]
    %v332 = vld [vmem:[#allocation8 + $0xc] sm:$0xf]
    %334 = vrot.lane.b32.xlu0 %v328, 32
    %v335 = vpop.permute.xlu0 %334
    %v340 = vunpack.c.l.b16 %v329
    %v341 = vunpack.c.l.b16 %v330
    %v342 = vunpack.c.l.b16 %v331
    %v343 = vunpack.c.l.b16 %v332
    %v344 = vpack.c.b16 %v341, %v340
    %v345 = vpack.c.b16 %v343, %v342
    %v349 = vsel %vm90, %v335, 0
    %351 = vmatprep.subr.bf16.mxu0 0
    %352 = vmatpush1.bf16.msra.mxu0 %v344
    %353 = vmatprep.subr.bf16.mxu0 0
    %354 = vmatpush1.bf16.msra.mxu0 %v345
    %355 = vmatprep.subr.bf16.mxu0 0
    %356 = vmatpush1.bf16.msra.mxu0 0
    %357 = vmatprep.subr.bf16.mxu0 0
    %358 = vmatpush1.bf16.msra.mxu0 0
    %359 = vmatprep.subr.bf16.mxu0 0
    %360 = vmatpush1.bf16.msra.mxu0 0
    %361 = vmatprep.subr.bf16.mxu0 0
    %362 = vmatpush1.bf16.msra.mxu0 0
    %363 = vmatprep.subr.bf16.mxu0 0
    %364 = vmatpush1.bf16.msra.mxu0 0
    %365 = vmatprep.subr.bf16.mxu0 0
    %366 = vmatpush1.bf16.msra.mxu0 0
    %367 = vmatprep.subr.bf16.mxu0 0
    %368 = vmatpush1.bf16.msra.mxu0 0
    %369 = vmatprep.subr.bf16.mxu0 0
    %370 = vmatpush1.bf16.msra.mxu0 0
    %371 = vmatprep.subr.bf16.mxu0 0
    %372 = vmatpush1.bf16.msra.mxu0 0
    %373 = vmatprep.subr.bf16.mxu0 0
    %374 = vmatpush1.bf16.msra.mxu0 0
    %375 = vmatprep.subr.bf16.mxu0 0
    %376 = vmatpush1.bf16.msra.mxu0 0
    %377 = vmatprep.subr.bf16.mxu0 0
    %378 = vmatpush1.bf16.msra.mxu0 0
    %379 = vmatprep.subr.bf16.mxu0 0
    %380 = vmatpush1.bf16.msra.mxu0 0
    %381 = vmatprep.subr.bf16.mxu0 0
    %382 = vmatpush1.bf16.msra.mxu0 0
    %383 = vmatprep.mubr.bf16.mxu0 0
    %384 = vmatmul.mubr.bf16.gmra.mrb[0].mxu0 %v349
    %v385 = vpop.f32.mrb[0].mxu0
    %v386 = vadd.f32 0.0, %v385
    %v387 = vpop.f32.mrb[0].mxu0
    %v388 = vpop.f32.mrb[0].mxu0
    %v389 = vpop.f32.mrb[0].mxu0
    %390 = vdwg.mxu0
    %v391 = vadd.f32 %v327, %v386
    %v392 = vxor.u32 %v391, 2147483648
    %v393 = vmul.f32 %v392, 1.442695
    %v394 = vpow.pop %v393
    %v395 = vadd.f32 %v394, 1.0
    %v396 = vrcp.pop %v395
    %v397 = vmul.f32 1.0, %v396
    %v398 = vmul.f32 %v397, 2.0
    %v399 = vsub.f32 %v398, 1.0
    %v400 = vmul.f32 %v397, %v313
    %402 = vrot.lane.b32.xlu0 %v399, 64
    %v403 = vpop.permute.xlu0 %402
    %v405 = vmul.f32 %v397, %v403
    %407 = vrot.lane.b32.xlu0 %v405, 32
    %v408 = vpop.permute.xlu0 %407
    %v410 = vadd.f32 %v400, %v408
    %v411 = vtanh.pop %v410
    %413 = vrot.lane.b32.xlu0 %v411, 64
    %v414 = vpop.permute.xlu0 %413
    %v416 = vmul.f32 %v397, %v414
    %418 = vrot.lane.b32.xlu0 %v416, 32
    %v419 = vpop.permute.xlu0 %418
    %s421 = scalar_lea.vmem [#allocation9], 4
    %422 = vst.msk [vmem:[%s421] sm:$0x3] %vm227, %v419
    %s423 = scalar_lea.vmem [#allocation2], 6
    %v424 = vld [vmem:[%s423] sm:$0x3]
    %v425 = vpack.c.bf16 %v416, %v416
    %v426 = vld [vmem:[#allocation8] sm:$0xf]
    %v427 = vld [vmem:[#allocation8 + $0x4] sm:$0xf]
    %v428 = vld [vmem:[#allocation8 + $0x8] sm:$0xf]
    %v429 = vld [vmem:[#allocation8 + $0xc] sm:$0xf]
    %431 = vrot.lane.b32.xlu0 %v425, 32
    %v432 = vpop.permute.xlu0 %431
    %v437 = vunpack.c.l.b16 %v426
    %v438 = vunpack.c.l.b16 %v427
    %v439 = vunpack.c.l.b16 %v428
    %v440 = vunpack.c.l.b16 %v429
    %v441 = vpack.c.b16 %v438, %v437
    %v442 = vpack.c.b16 %v440, %v439
    %v446 = vsel %vm90, %v432, 0
    %448 = vmatprep.subr.bf16.mxu0 0
    %449 = vmatpush1.bf16.msra.mxu0 %v441
    %450 = vmatprep.subr.bf16.mxu0 0
    %451 = vmatpush1.bf16.msra.mxu0 %v442
    %452 = vmatprep.subr.bf16.mxu0 0
    %453 = vmatpush1.bf16.msra.mxu0 0
    %454 = vmatprep.subr.bf16.mxu0 0
    %455 = vmatpush1.bf16.msra.mxu0 0
    %456 = vmatprep.subr.bf16.mxu0 0
    %457 = vmatpush1.bf16.msra.mxu0 0
    %458 = vmatprep.subr.bf16.mxu0 0
    %459 = vmatpush1.bf16.msra.mxu0 0
    %460 = vmatprep.subr.bf16.mxu0 0
    %461 = vmatpush1.bf16.msra.mxu0 0
    %462 = vmatprep.subr.bf16.mxu0 0
    %463 = vmatpush1.bf16.msra.mxu0 0
    %464 = vmatprep.subr.bf16.mxu0 0
    %465 = vmatpush1.bf16.msra.mxu0 0
    %466 = vmatprep.subr.bf16.mxu0 0
    %467 = vmatpush1.bf16.msra.mxu0 0
    %468 = vmatprep.subr.bf16.mxu0 0
    %469 = vmatpush1.bf16.msra.mxu0 0
    %470 = vmatprep.subr.bf16.mxu0 0
    %471 = vmatpush1.bf16.msra.mxu0 0
    %472 = vmatprep.subr.bf16.mxu0 0
    %473 = vmatpush1.bf16.msra.mxu0 0
    %474 = vmatprep.subr.bf16.mxu0 0
    %475 = vmatpush1.bf16.msra.mxu0 0
    %476 = vmatprep.subr.bf16.mxu0 0
    %477 = vmatpush1.bf16.msra.mxu0 0
    %478 = vmatprep.subr.bf16.mxu0 0
    %479 = vmatpush1.bf16.msra.mxu0 0
    %480 = vmatprep.mubr.bf16.mxu0 0
    %481 = vmatmul.mubr.bf16.gmra.mrb[0].mxu0 %v446
    %v482 = vpop.f32.mrb[0].mxu0
    %v483 = vadd.f32 0.0, %v482
    %v484 = vpop.f32.mrb[0].mxu0
    %v485 = vpop.f32.mrb[0].mxu0
    %v486 = vpop.f32.mrb[0].mxu0
    %487 = vdwg.mxu0
    %v488 = vadd.f32 %v424, %v483
    %v489 = vxor.u32 %v488, 2147483648
    %v490 = vmul.f32 %v489, 1.442695
    %v491 = vpow.pop %v490
    %v492 = vadd.f32 %v491, 1.0
    %v493 = vrcp.pop %v492
    %v494 = vmul.f32 1.0, %v493
    %v495 = vmul.f32 %v494, 2.0
    %v496 = vsub.f32 %v495, 1.0
    %v497 = vmul.f32 %v494, %v410
    %499 = vrot.lane.b32.xlu0 %v496, 64
    %v500 = vpop.permute.xlu0 %499
    %v502 = vmul.f32 %v494, %v500
    %504 = vrot.lane.b32.xlu0 %v502, 32
    %v505 = vpop.permute.xlu0 %504
    %v507 = vadd.f32 %v497, %v505
    %v508 = vtanh.pop %v507
    %510 = vrot.lane.b32.xlu0 %v508, 64
    %v511 = vpop.permute.xlu0 %510
    %v513 = vmul.f32 %v494, %v511
    %515 = vrot.lane.b32.xlu0 %v513, 32
    %v516 = vpop.permute.xlu0 %515
    %s518 = scalar_lea.vmem [#allocation9], 6
    %519 = vst.msk [vmem:[%s518] sm:$0x3] %vm227, %v516
    %s520 = scalar_lea.vmem [#allocation2], 8
    %v521 = vld [vmem:[%s520] sm:$0x3]
    %v522 = vpack.c.bf16 %v513, %v513
    %v523 = vld [vmem:[#allocation8] sm:$0xf]
    %v524 = vld [vmem:[#allocation8 + $0x4] sm:$0xf]
    %v525 = vld [vmem:[#allocation8 + $0x8] sm:$0xf]
    %v526 = vld [vmem:[#allocation8 + $0xc] sm:$0xf]
    %528 = vrot.lane.b32.xlu0 %v522, 32
    %v529 = vpop.permute.xlu0 %528
    %v534 = vunpack.c.l.b16 %v523
    %v535 = vunpack.c.l.b16 %v524
    %v536 = vunpack.c.l.b16 %v525
    %v537 = vunpack.c.l.b16 %v526
    %v538 = vpack.c.b16 %v535, %v534
    %v539 = vpack.c.b16 %v537, %v536
    %v543 = vsel %vm90, %v529, 0
    %545 = vmatprep.subr.bf16.mxu0 0
    %546 = vmatpush1.bf16.msra.mxu0 %v538
    %547 = vmatprep.subr.bf16.mxu0 0
    %548 = vmatpush1.bf16.msra.mxu0 %v539
    %549 = vmatprep.subr.bf16.mxu0 0
    %550 = vmatpush1.bf16.msra.mxu0 0
    %551 = vmatprep.subr.bf16.mxu0 0
    %552 = vmatpush1.bf16.msra.mxu0 0
    %553 = vmatprep.subr.bf16.mxu0 0
    %554 = vmatpush1.bf16.msra.mxu0 0
    %555 = vmatprep.subr.bf16.mxu0 0
    %556 = vmatpush1.bf16.msra.mxu0 0
    %557 = vmatprep.subr.bf16.mxu0 0
    %558 = vmatpush1.bf16.msra.mxu0 0
    %559 = vmatprep.subr.bf16.mxu0 0
    %560 = vmatpush1.bf16.msra.mxu0 0
    %561 = vmatprep.subr.bf16.mxu0 0
    %562 = vmatpush1.bf16.msra.mxu0 0
    %563 = vmatprep.subr.bf16.mxu0 0
    %564 = vmatpush1.bf16.msra.mxu0 0
    %565 = vmatprep.subr.bf16.mxu0 0
    %566 = vmatpush1.bf16.msra.mxu0 0
    %567 = vmatprep.subr.bf16.mxu0 0
    %568 = vmatpush1.bf16.msra.mxu0 0
    %569 = vmatprep.subr.bf16.mxu0 0
    %570 = vmatpush1.bf16.msra.mxu0 0
    %571 = vmatprep.subr.bf16.mxu0 0
    %572 = vmatpush1.bf16.msra.mxu0 0
    %573 = vmatprep.subr.bf16.mxu0 0
    %574 = vmatpush1.bf16.msra.mxu0 0
    %575 = vmatprep.subr.bf16.mxu0 0
    %576 = vmatpush1.bf16.msra.mxu0 0
    %577 = vmatprep.mubr.bf16.mxu0 0
    %578 = vmatmul.mubr.bf16.gmra.mrb[0].mxu0 %v543
    %v579 = vpop.f32.mrb[0].mxu0
    %v580 = vadd.f32 0.0, %v579
    %v581 = vpop.f32.mrb[0].mxu0
    %v582 = vpop.f32.mrb[0].mxu0
    %v583 = vpop.f32.mrb[0].mxu0
    %584 = vdwg.mxu0
    %v585 = vadd.f32 %v521, %v580
    %v586 = vxor.u32 %v585, 2147483648
    %v587 = vmul.f32 %v586, 1.442695
    %v588 = vpow.pop %v587
    %v589 = vadd.f32 %v588, 1.0
    %v590 = vrcp.pop %v589
    %v591 = vmul.f32 1.0, %v590
    %v592 = vmul.f32 %v591, 2.0
    %v593 = vsub.f32 %v592, 1.0
    %v594 = vmul.f32 %v591, %v507
    %596 = vrot.lane.b32.xlu0 %v593, 64
    %v597 = vpop.permute.xlu0 %596
    %v599 = vmul.f32 %v591, %v597
    %601 = vrot.lane.b32.xlu0 %v599, 32
    %v602 = vpop.permute.xlu0 %601
    %v604 = vadd.f32 %v594, %v602
    %v605 = vtanh.pop %v604
    %607 = vrot.lane.b32.xlu0 %v605, 64
    %v608 = vpop.permute.xlu0 %607
    %v610 = vmul.f32 %v591, %v608
    %612 = vrot.lane.b32.xlu0 %v610, 32
    %v613 = vpop.permute.xlu0 %612
    %s615 = scalar_lea.vmem [#allocation9], 8
    %616 = vst.msk [vmem:[%s615] sm:$0x3] %vm227, %v613
    %s617 = scalar_lea.vmem [#allocation2], 10
    %v618 = vld [vmem:[%s617] sm:$0x3]
    %v619 = vpack.c.bf16 %v610, %v610
    %v620 = vld [vmem:[#allocation8] sm:$0xf]
    %v621 = vld [vmem:[#allocation8 + $0x4] sm:$0xf]
    %v622 = vld [vmem:[#allocation8 + $0x8] sm:$0xf]
    %v623 = vld [vmem:[#allocation8 + $0xc] sm:$0xf]
    %625 = vrot.lane.b32.xlu0 %v619, 32
    %v626 = vpop.permute.xlu0 %625
    %v631 = vunpack.c.l.b16 %v620
    %v632 = vunpack.c.l.b16 %v621
    %v633 = vunpack.c.l.b16 %v622
    %v634 = vunpack.c.l.b16 %v623
    %v635 = vpack.c.b16 %v632, %v631
    %v636 = vpack.c.b16 %v634, %v633
    %v640 = vsel %vm90, %v626, 0
    %642 = vmatprep.subr.bf16.mxu0 0
    %643 = vmatpush1.bf16.msra.mxu0 %v635
    %644 = vmatprep.subr.bf16.mxu0 0
    %645 = vmatpush1.bf16.msra.mxu0 %v636
    %646 = vmatprep.subr.bf16.mxu0 0
    %647 = vmatpush1.bf16.msra.mxu0 0
    %648 = vmatprep.subr.bf16.mxu0 0
    %649 = vmatpush1.bf16.msra.mxu0 0
    %650 = vmatprep.subr.bf16.mxu0 0
    %651 = vmatpush1.bf16.msra.mxu0 0
    %652 = vmatprep.subr.bf16.mxu0 0
    %653 = vmatpush1.bf16.msra.mxu0 0
    %654 = vmatprep.subr.bf16.mxu0 0
    %655 = vmatpush1.bf16.msra.mxu0 0
    %656 = vmatprep.subr.bf16.mxu0 0
    %657 = vmatpush1.bf16.msra.mxu0 0
    %658 = vmatprep.subr.bf16.mxu0 0
    %659 = vmatpush1.bf16.msra.mxu0 0
    %660 = vmatprep.subr.bf16.mxu0 0
    %661 = vmatpush1.bf16.msra.mxu0 0
    %662 = vmatprep.subr.bf16.mxu0 0
    %663 = vmatpush1.bf16.msra.mxu0 0
    %664 = vmatprep.subr.bf16.mxu0 0
    %665 = vmatpush1.bf16.msra.mxu0 0
    %666 = vmatprep.subr.bf16.mxu0 0
    %667 = vmatpush1.bf16.msra.mxu0 0
    %668 = vmatprep.subr.bf16.mxu0 0
    %669 = vmatpush1.bf16.msra.mxu0 0
    %670 = vmatprep.subr.bf16.mxu0 0
    %671 = vmatpush1.bf16.msra.mxu0 0
    %672 = vmatprep.subr.bf16.mxu0 0
    %673 = vmatpush1.bf16.msra.mxu0 0
    %674 = vmatprep.mubr.bf16.mxu0 0
    %675 = vmatmul.mubr.bf16.gmra.mrb[0].mxu0 %v640
    %v676 = vpop.f32.mrb[0].mxu0
    %v677 = vadd.f32 0.0, %v676
    %v678 = vpop.f32.mrb[0].mxu0
    %v679 = vpop.f32.mrb[0].mxu0
    %v680 = vpop.f32.mrb[0].mxu0
    %681 = vdwg.mxu0
    %v682 = vadd.f32 %v618, %v677
    %v683 = vxor.u32 %v682, 2147483648
    %v684 = vmul.f32 %v683, 1.442695
    %v685 = vpow.pop %v684
    %v686 = vadd.f32 %v685, 1.0
    %v687 = vrcp.pop %v686
    %v688 = vmul.f32 1.0, %v687
    %v689 = vmul.f32 %v688, 2.0
    %v690 = vsub.f32 %v689, 1.0
    %v691 = vmul.f32 %v688, %v604
    %693 = vrot.lane.b32.xlu0 %v690, 64
    %v694 = vpop.permute.xlu0 %693
    %v696 = vmul.f32 %v688, %v694
    %698 = vrot.lane.b32.xlu0 %v696, 32
    %v699 = vpop.permute.xlu0 %698
    %v701 = vadd.f32 %v691, %v699
    %v702 = vtanh.pop %v701
    %704 = vrot.lane.b32.xlu0 %v702, 64
    %v705 = vpop.permute.xlu0 %704
    %v707 = vmul.f32 %v688, %v705
    %709 = vrot.lane.b32.xlu0 %v707, 32
    %v710 = vpop.permute.xlu0 %709
    %s712 = scalar_lea.vmem [#allocation9], 10
    %713 = vst.msk [vmem:[%s712] sm:$0x3] %vm227, %v710
    %s714 = scalar_lea.vmem [#allocation2], 12
    %v715 = vld [vmem:[%s714] sm:$0x3]
    %v716 = vpack.c.bf16 %v707, %v707
    %v717 = vld [vmem:[#allocation8] sm:$0xf]
    %v718 = vld [vmem:[#allocation8 + $0x4] sm:$0xf]
    %v719 = vld [vmem:[#allocation8 + $0x8] sm:$0xf]
    %v720 = vld [vmem:[#allocation8 + $0xc] sm:$0xf]
    %722 = vrot.lane.b32.xlu0 %v716, 32
    %v723 = vpop.permute.xlu0 %722
    %v728 = vunpack.c.l.b16 %v717
    %v729 = vunpack.c.l.b16 %v718
    %v730 = vunpack.c.l.b16 %v719
    %v731 = vunpack.c.l.b16 %v720
    %v732 = vpack.c.b16 %v729, %v728
    %v733 = vpack.c.b16 %v731, %v730
    %v737 = vsel %vm90, %v723, 0
    %739 = vmatprep.subr.bf16.mxu0 0
    %740 = vmatpush1.bf16.msra.mxu0 %v732
    %741 = vmatprep.subr.bf16.mxu0 0
    %742 = vmatpush1.bf16.msra.mxu0 %v733
    %743 = vmatprep.subr.bf16.mxu0 0
    %744 = vmatpush1.bf16.msra.mxu0 0
    %745 = vmatprep.subr.bf16.mxu0 0
    %746 = vmatpush1.bf16.msra.mxu0 0
    %747 = vmatprep.subr.bf16.mxu0 0
    %748 = vmatpush1.bf16.msra.mxu0 0
    %749 = vmatprep.subr.bf16.mxu0 0
    %750 = vmatpush1.bf16.msra.mxu0 0
    %751 = vmatprep.subr.bf16.mxu0 0
    %752 = vmatpush1.bf16.msra.mxu0 0
    %753 = vmatprep.subr.bf16.mxu0 0
    %754 = vmatpush1.bf16.msra.mxu0 0
    %755 = vmatprep.subr.bf16.mxu0 0
    %756 = vmatpush1.bf16.msra.mxu0 0
    %757 = vmatprep.subr.bf16.mxu0 0
    %758 = vmatpush1.bf16.msra.mxu0 0
    %759 = vmatprep.subr.bf16.mxu0 0
    %760 = vmatpush1.bf16.msra.mxu0 0
    %761 = vmatprep.subr.bf16.mxu0 0
    %762 = vmatpush1.bf16.msra.mxu0 0
    %763 = vmatprep.subr.bf16.mxu0 0
    %764 = vmatpush1.bf16.msra.mxu0 0
    %765 = vmatprep.subr.bf16.mxu0 0
    %766 = vmatpush1.bf16.msra.mxu0 0
    %767 = vmatprep.subr.bf16.mxu0 0
    %768 = vmatpush1.bf16.msra.mxu0 0
    %769 = vmatprep.subr.bf16.mxu0 0
    %770 = vmatpush1.bf16.msra.mxu0 0
    %771 = vmatprep.mubr.bf16.mxu0 0
    %772 = vmatmul.mubr.bf16.gmra.mrb[0].mxu0 %v737
    %v773 = vpop.f32.mrb[0].mxu0
    %v774 = vadd.f32 0.0, %v773
    %v775 = vpop.f32.mrb[0].mxu0
    %v776 = vpop.f32.mrb[0].mxu0
    %v777 = vpop.f32.mrb[0].mxu0
    %778 = vdwg.mxu0
    %v779 = vadd.f32 %v715, %v774
    %v780 = vxor.u32 %v779, 2147483648
    %v781 = vmul.f32 %v780, 1.442695
    %v782 = vpow.pop %v781
    %v783 = vadd.f32 %v782, 1.0
    %v784 = vrcp.pop %v783
    %v785 = vmul.f32 1.0, %v784
    %v786 = vmul.f32 %v785, 2.0
    %v787 = vsub.f32 %v786, 1.0
    %v788 = vmul.f32 %v785, %v701
    %790 = vrot.lane.b32.xlu0 %v787, 64
    %v791 = vpop.permute.xlu0 %790
    %v793 = vmul.f32 %v785, %v791
    %795 = vrot.lane.b32.xlu0 %v793, 32
    %v796 = vpop.permute.xlu0 %795
    %v798 = vadd.f32 %v788, %v796
    %v799 = vtanh.pop %v798
    %801 = vrot.lane.b32.xlu0 %v799, 64
    %v802 = vpop.permute.xlu0 %801
    %v804 = vmul.f32 %v785, %v802
    %806 = vrot.lane.b32.xlu0 %v804, 32
    %v807 = vpop.permute.xlu0 %806
    %s809 = scalar_lea.vmem [#allocation9], 12
    %810 = vst.msk [vmem:[%s809] sm:$0x3] %vm227, %v807
    %s811 = scalar_lea.vmem [#allocation2], 14
    %v812 = vld [vmem:[%s811] sm:$0x3]
    %v813 = vpack.c.bf16 %v804, %v804
    %v814 = vld [vmem:[#allocation8] sm:$0xf]
    %v815 = vld [vmem:[#allocation8 + $0x4] sm:$0xf]
    %v816 = vld [vmem:[#allocation8 + $0x8] sm:$0xf]
    %v817 = vld [vmem:[#allocation8 + $0xc] sm:$0xf]
    %819 = vrot.lane.b32.xlu0 %v813, 32
    %v820 = vpop.permute.xlu0 %819
    %v825 = vunpack.c.l.b16 %v814
    %v826 = vunpack.c.l.b16 %v815
    %v827 = vunpack.c.l.b16 %v816
    %v828 = vunpack.c.l.b16 %v817
    %v829 = vpack.c.b16 %v826, %v825
    %v830 = vpack.c.b16 %v828, %v827
    %v834 = vsel %vm90, %v820, 0
    %836 = vmatprep.subr.bf16.mxu0 0
    %837 = vmatpush1.bf16.msra.mxu0 %v829
    %838 = vmatprep.subr.bf16.mxu0 0
    %839 = vmatpush1.bf16.msra.mxu0 %v830
    %840 = vmatprep.subr.bf16.mxu0 0
    %841 = vmatpush1.bf16.msra.mxu0 0
    %842 = vmatprep.subr.bf16.mxu0 0
    %843 = vmatpush1.bf16.msra.mxu0 0
    %844 = vmatprep.subr.bf16.mxu0 0
    %845 = vmatpush1.bf16.msra.mxu0 0
    %846 = vmatprep.subr.bf16.mxu0 0
    %847 = vmatpush1.bf16.msra.mxu0 0
    %848 = vmatprep.subr.bf16.mxu0 0
    %849 = vmatpush1.bf16.msra.mxu0 0
    %850 = vmatprep.subr.bf16.mxu0 0
    %851 = vmatpush1.bf16.msra.mxu0 0
    %852 = vmatprep.subr.bf16.mxu0 0
    %853 = vmatpush1.bf16.msra.mxu0 0
    %854 = vmatprep.subr.bf16.mxu0 0
    %855 = vmatpush1.bf16.msra.mxu0 0
    %856 = vmatprep.subr.bf16.mxu0 0
    %857 = vmatpush1.bf16.msra.mxu0 0
    %858 = vmatprep.subr.bf16.mxu0 0
    %859 = vmatpush1.bf16.msra.mxu0 0
    %860 = vmatprep.subr.bf16.mxu0 0
    %861 = vmatpush1.bf16.msra.mxu0 0
    %862 = vmatprep.subr.bf16.mxu0 0
    %863 = vmatpush1.bf16.msra.mxu0 0
    %864 = vmatprep.subr.bf16.mxu0 0
    %865 = vmatpush1.bf16.msra.mxu0 0
    %866 = vmatprep.subr.bf16.mxu0 0
    %867 = vmatpush1.bf16.msra.mxu0 0
    %868 = vmatprep.mubr.bf16.mxu0 0
    %869 = vmatmul.mubr.bf16.gmra.mrb[0].mxu0 %v834
    %v870 = vpop.f32.mrb[0].mxu0
    %v871 = vadd.f32 0.0, %v870
    %v872 = vpop.f32.mrb[0].mxu0
    %v873 = vpop.f32.mrb[0].mxu0
    %v874 = vpop.f32.mrb[0].mxu0
    %875 = vdwg.mxu0
    %v876 = vadd.f32 %v812, %v871
    %v877 = vxor.u32 %v876, 2147483648
    %v878 = vmul.f32 %v877, 1.442695
    %v879 = vpow.pop %v878
    %v880 = vadd.f32 %v879, 1.0
    %v881 = vrcp.pop %v880
    %v882 = vmul.f32 1.0, %v881
    %v883 = vmul.f32 %v882, 2.0
    %v884 = vsub.f32 %v883, 1.0
    %v885 = vmul.f32 %v882, %v798
    %887 = vrot.lane.b32.xlu0 %v884, 64
    %v888 = vpop.permute.xlu0 %887
    %v890 = vmul.f32 %v882, %v888
    %892 = vrot.lane.b32.xlu0 %v890, 32
    %v893 = vpop.permute.xlu0 %892
    %v895 = vadd.f32 %v885, %v893
    %v896 = vtanh.pop %v895
    %898 = vrot.lane.b32.xlu0 %v896, 64
    %v899 = vpop.permute.xlu0 %898
    %v901 = vmul.f32 %v882, %v899
    %903 = vrot.lane.b32.xlu0 %v901, 32
    %v904 = vpop.permute.xlu0 %903
    %s906 = scalar_lea.vmem [#allocation9], 14
    %907 = vst.msk [vmem:[%s906] sm:$0x3] %vm227, %v904
    // Predicated region
    $region30: #{tpu_custom_call.1} parent=1 // pred_check
      _
    $region31: #{tpu_custom_call.1} parent=1 // pred_check_branch
      %909 = sbr.rel (0) target = $region33
    $region32: #{tpu_custom_call.1} parent=1 // pred_region
      %s911 = ssub.s32 256, 256
      %912 = vsyncadd [#allocation5], %s911
      %s913 = sshll.u32 [#allocation9], 4
      %s914 = int_to_ptr.vmem [resolvable:$true] %s913
      %919 = dma.vmem_to_hbm [thread:$0]  %s914, 256, %s4, [#allocation5], 128, 128, 8
    $region33: #{tpu_custom_call.1} parent=1 // pred_fallthru
      _
    // Predicated region
    $region34: #{tpu_custom_call.1} parent=1 // pred_check
      _
    $region35: #{tpu_custom_call.1} parent=1 // pred_check_branch
      %921 = sbr.rel (0) target = $region37
    $region36: #{tpu_custom_call.1} parent=1 // pred_region
      %922 = dma.done [#allocation5], 256
    $region37: #{tpu_custom_call.1} parent=1 // pred_fallthru
      _
    %923 = vsyncpa [#allocation4], 1
    %924 = vsyncpa [#allocation7], 1
    %925 = vsyncpa [#allocation5], 1

</llo_original>
